<compile_context>
chip_gen: v7x
topology: tpu7x:2x2x1
jax: 0.10.0
libtpu: 0.0.40
codegen_flags: <defaults>
</compile_context>

<pallas_src>
import functools
import math

import jax
import jax.numpy as jnp
from jax.experimental import pallas as pl
from jax.experimental.pallas import tpu as pltpu


# ----------------------------------------------------------------------------
# helpers
# ----------------------------------------------------------------------------
def _largest_divisor_leq(total, cap):
    cap = max(1, min(total, cap))
    for d in range(cap, 0, -1):
        if total % d == 0:
            return d
    return 1


def _gate_math(gate_type, c, s, xr0, xi0, xr1, xi1):
    # (y0, y1) = A @ (x0, x1) with A = lower-right 2x2 block of the controlled
    # rotation (control = 1), c = cos(theta/2), s = sin(theta/2).
    if gate_type == "CRX":        # A = [[c, -i s], [-i s, c]]
        yr0 = c * xr0 + s * xi1
        yi0 = c * xi0 - s * xr1
        yr1 = s * xi0 + c * xr1
        yi1 = -s * xr0 + c * xi1
    elif gate_type == "CRY":      # A = [[c, -s], [s, c]]  (real)
        yr0 = c * xr0 - s * xr1
        yi0 = c * xi0 - s * xi1
        yr1 = s * xr0 + c * xr1
        yi1 = s * xi0 + c * xi1
    elif gate_type == "CRZ":      # A = diag(c - i s, c + i s)
        yr0 = c * xr0 + s * xi0
        yi0 = c * xi0 - s * xr0
        yr1 = c * xr1 - s * xi1
        yi1 = c * xi1 + s * xr1
    else:
        raise ValueError("Invalid gate type")
    return yr0, yi0, yr1, yi1


def _make_kernel(gate_type, fast):
    def kernel(coef_ref, sr_ref, si_ref, or_ref, oi_ref):
        c = coef_ref[0]          # cos(theta/2)  (SMEM scalar)
        s = coef_ref[1]          # sin(theta/2)
        xr = sr_ref[...]
        xi = si_ref[...]
        if fast:
            # Block covers only the control=1 half: (TB, 1, TQ, 2, TR),
            # axis 3 = target bit.
            xr0 = xr[:, :, :, 0, :]
            xr1 = xr[:, :, :, 1, :]
            xi0 = xi[:, :, :, 0, :]
            xi1 = xi[:, :, :, 1, :]
            yr0, yi0, yr1, yi1 = _gate_math(gate_type, c, s, xr0, xi0, xr1, xi1)
            or_ref[...] = jnp.stack([yr0, yr1], axis=3)
            oi_ref[...] = jnp.stack([yi0, yi1], axis=3)
        else:
            # General path (wire2 < wire1): block (TB, 2, TQ, 2, TR),
            # axis 1 = target bit, axis 3 = control bit.  control=0 half is a
            # pass-through copy (cannot be skipped via BlockSpec here without
            # violating the (8,128) second-to-last-dim rule).
            xr0 = xr[:, 0, :, 1, :]
            xr1 = xr[:, 1, :, 1, :]
            xi0 = xi[:, 0, :, 1, :]
            xi1 = xi[:, 1, :, 1, :]
            yr0, yi0, yr1, yi1 = _gate_math(gate_type, c, s, xr0, xi0, xr1, xi1)
            newr = jnp.stack([yr0, yr1], axis=1)          # (TB, 2, TQ, TR)
            newi = jnp.stack([yi0, yi1], axis=1)
            or_ref[...] = jnp.stack([xr[:, :, :, 0, :], newr], axis=3)
            oi_ref[...] = jnp.stack([xi[:, :, :, 0, :], newi], axis=3)
    return kernel


# ----------------------------------------------------------------------------
# fused, tiled controlled-rotation application
# ----------------------------------------------------------------------------
@functools.partial(jax.jit, static_argnums=(3, 4, 5))
def _apply_crot(weight, state_r, state_i, gate_type, wire1, wire2):
    B, dim = state_r.shape
    n = int(round(math.log2(dim)))
    assert 2 ** n == dim, "state dimension must be a power of two"
    assert wire1 != wire2 and 0 <= wire1 < n and 0 <= wire2 < n

    w_lo, w_hi = (wire1, wire2) if wire1 < wire2 else (wire2, wire1)
    P = 2 ** w_lo                       # bits above the shallow wire
    Q = 2 ** (w_hi - w_lo - 1)          # bits between the two wires
    R = 2 ** (n - w_hi - 1)             # bits below the deep wire (lane axis)
    Bp = B * P
    view = (Bp, 2, Q, 2, R)             # free reshape, no data movement

    srv = state_r.astype(jnp.float32).reshape(view)
    siv = state_i.astype(jnp.float32).reshape(view)

    half = weight.astype(jnp.float32) * 0.5
    coef = jnp.stack([jnp.cos(half), jnp.sin(half)])     # (2,) f32 -> SMEM

    fast = wire1 < wire2   # control bit lives on axis 1 -> skip control=0 half

    # ---- tile sizes: lane-dense last dim, VMEM-safe across v5e/v6e/v7x ------
    budget = 128 * 1024                        # f32 elems per block per array
    width = 1 if fast else 2                   # axis-1 extent inside a block
    TR = R if R <= 2048 else 2048              # power-of-two R => divides, %128==0
    TQ = _largest_divisor_leq(Q, max(1, budget // (width * 2 * TR)))
    TB = _largest_divisor_leq(Bp, max(1, budget // (width * 2 * TR * TQ)))
    grid = (Bp // TB, Q // TQ, R // TR)

    if fast:
        blk = (TB, 1, TQ, 2, TR)
        imap = lambda i, q, r: (i, 1, q, 0, r)           # control = 1 half only
    else:
        blk = (TB, 2, TQ, 2, TR)
        imap = lambda i, q, r: (i, 0, q, 0, r)

    state_spec = pl.BlockSpec(blk, imap)
    coef_spec = pl.BlockSpec(memory_space=pltpu.MemorySpace.SMEM)

    out_r, out_i = pl.pallas_call(
        _make_kernel(gate_type, fast),
        grid=grid,
        in_specs=[coef_spec, state_spec, state_spec],
        out_specs=(state_spec, state_spec),
        out_shape=(jax.ShapeDtypeStruct(view, jnp.float32),
                   jax.ShapeDtypeStruct(view, jnp.float32)),
        # fast path: untouched control=0 half is carried through by aliasing
        input_output_aliases=({1: 0, 2: 1} if fast else {}),
        compiler_params=pltpu.CompilerParams(
            dimension_semantics=("parallel", "parallel", "parallel")),
    )(coef, srv, siv)

    return out_r.reshape(B, dim), out_i.reshape(B, dim)


# ----------------------------------------------------------------------------
# SharedWeights module equivalent
# ----------------------------------------------------------------------------
class SharedWeights:
    """Pallas/JAX equivalent of the torchquantum SharedWeights module.

    The quantum state is passed as two real float32 arrays (real, imag) of
    shape (batch, 2**n_wires).  gate_type in {"CRX","CRY","CRZ"}; wire1 is the
    control wire, wire2 the target wire.
    """

    def __init__(self, weight):
        self.weight = jnp.asarray(weight, jnp.float32)

    def __call__(self, state_r, state_i, gate_type, wire1, wire2):
        return _apply_crot(self.weight, state_r, state_i,
                           str(gate_type), int(wire1), int(wire2))


# ----------------------------------------------------------------------------
# Reference (plain-JAX, complex) for a silent correctness check
# ----------------------------------------------------------------------------
def _reference(weight, state_r, state_i, gate_type, wire1, wire2):
    theta = jnp.asarray(weight, jnp.float32)
    c = jnp.cos(theta / 2).astype(jnp.complex64)
    s = jnp.sin(theta / 2).astype(jnp.complex64)
    if gate_type == "CRX":
        A = jnp.stack([jnp.stack([c, -1j * s]), jnp.stack([-1j * s, c])])
    elif gate_type == "CRY":
        A = jnp.stack([jnp.stack([c, -s]), jnp.stack([s, c])])
    elif gate_type == "CRZ":
        A = jnp.stack([jnp.stack([c - 1j * s, 0 * c]),
                       jnp.stack([0 * c, c + 1j * s])])
    else:
        raise ValueError("Invalid gate type")
    U = jnp.eye(4, dtype=jnp.complex64).at[2:, 2:].set(A)

    psi = state_r.astype(jnp.complex64) + 1j * state_i.astype(jnp.complex64)
    B, dim = psi.shape
    n = int(round(math.log2(dim)))
    R = dim // 4
    x = psi.reshape((B,) + (2,) * n)
    x = jnp.moveaxis(x, (wire1 + 1, wire2 + 1), (1, 2)).reshape(B, 4, R)
    y = jnp.einsum("ij,bjr->bir", U, x)
    y = y.reshape((B, 2, 2) + (2,) * (n - 2))
    y = jnp.moveaxis(y, (1, 2), (wire1 + 1, wire2 + 1)).reshape(B, dim)
    return jnp.real(y), jnp.imag(y)


if __name__ == "__main__":
    key = jax.random.PRNGKey(0)
    k_w, k_r, k_i = jax.random.split(key, 3)

    # small problem: batch=2, n_wires=5 -> state dim 32
    batch, n_wires = 2, 5
    dim = 2 ** n_wires
    weight = jax.random.normal(k_w, ())            # shared scalar rotation angle
    sr = jax.random.normal(k_r, (batch, dim), jnp.float32)
    si = jax.random.normal(k_i, (batch, dim), jnp.float32)
    norm = jnp.sqrt(jnp.sum(sr * sr + si * si, axis=1, keepdims=True))
    sr, si = sr / norm, si / norm                  # normalized quantum state

    mod = SharedWeights(weight)

    ok = True
    for gate_type in ("CRX", "CRY", "CRZ"):
        for (w1, w2) in ((1, 3), (3, 1)):          # fast path and general path
            out_r, out_i = mod(sr, si, gate_type, w1, w2)
            out_r = jax.block_until_ready(out_r)
            out_i = jax.block_until_ready(out_i)
            ref_r, ref_i = _reference(weight, sr, si, gate_type, w1, w2)
            ok &= bool(jnp.allclose(out_r, ref_r, atol=1e-5))
            ok &= bool(jnp.allclose(out_i, ref_i, atol=1e-5))

    assert ok, "Pallas kernel mismatch vs reference"
    print("KERNEL_OK")
</pallas_src>

<mosaic_0001>
module attributes {stable_mosaic.version = 11 : i64} {
  func.func @kernel(%arg0: i32, %arg1: i32, %arg2: i32, %arg3: memref<2xf32, #tpu.memory_space<smem>>, %arg4: memref<4x1x2x2x2xf32, #tpu.memory_space<vmem>>, %arg5: memref<4x1x2x2x2xf32, #tpu.memory_space<vmem>>, %arg6: memref<4x1x2x2x2xf32, #tpu.memory_space<vmem>>, %arg7: memref<4x1x2x2x2xf32, #tpu.memory_space<vmem>>) attributes {dimension_semantics = [#tpu.dimension_semantics<parallel>, #tpu.dimension_semantics<parallel>, #tpu.dimension_semantics<parallel>], iteration_bounds = array<i64: 1, 1, 1>, scalar_prefetch = 0 : i64, scratch_operands = 0 : i64, tpu.core_type = #tpu.core_type<tc>, window_params = [{transform_indices = @transform_0, window_bounds = array<i64: 2>}, {transform_indices = @transform_1, window_bounds = array<i64: 4, 1, 2, 2, 2>}, {transform_indices = @transform_2, window_bounds = array<i64: 4, 1, 2, 2, 2>}, {transform_indices = @transform_3, window_bounds = array<i64: 4, 1, 2, 2, 2>}, {transform_indices = @transform_4, window_bounds = array<i64: 4, 1, 2, 2, 2>}]} {
    %c0 = arith.constant 0 : index
    %0 = memref.load %arg3[%c0] : memref<2xf32, #tpu.memory_space<smem>>
    %c1 = arith.constant 1 : index
    %1 = memref.load %arg3[%c1] : memref<2xf32, #tpu.memory_space<smem>>
    %c0_0 = arith.constant 0 : index
    %c0_1 = arith.constant 0 : index
    %c0_2 = arith.constant 0 : index
    %c0_3 = arith.constant 0 : index
    %c0_4 = arith.constant 0 : index
    %2 = vector.load %arg4[%c0_0, %c0_1, %c0_2, %c0_3, %c0_4] : memref<4x1x2x2x2xf32, #tpu.memory_space<vmem>>, vector<4x1x2x2x2xf32>
    %c0_5 = arith.constant 0 : index
    %c0_6 = arith.constant 0 : index
    %c0_7 = arith.constant 0 : index
    %c0_8 = arith.constant 0 : index
    %c0_9 = arith.constant 0 : index
    %3 = vector.load %arg5[%c0_5, %c0_6, %c0_7, %c0_8, %c0_9] : memref<4x1x2x2x2xf32, #tpu.memory_space<vmem>>, vector<4x1x2x2x2xf32>
    %4 = vector.extract_strided_slice %2 {offsets = [0, 0, 0, 0, 0], sizes = [4, 1, 2, 1, 2], strides = [1, 1, 1, 1, 1]} : vector<4x1x2x2x2xf32> to vector<4x1x2x1x2xf32>
    %5 = vector.shape_cast %4 : vector<4x1x2x1x2xf32> to vector<4x1x2x2xf32>
    %6 = vector.extract_strided_slice %2 {offsets = [0, 0, 0, 1, 0], sizes = [4, 1, 2, 1, 2], strides = [1, 1, 1, 1, 1]} : vector<4x1x2x2x2xf32> to vector<4x1x2x1x2xf32>
    %7 = vector.shape_cast %6 : vector<4x1x2x1x2xf32> to vector<4x1x2x2xf32>
    %8 = vector.extract_strided_slice %3 {offsets = [0, 0, 0, 0, 0], sizes = [4, 1, 2, 1, 2], strides = [1, 1, 1, 1, 1]} : vector<4x1x2x2x2xf32> to vector<4x1x2x1x2xf32>
    %9 = vector.shape_cast %8 : vector<4x1x2x1x2xf32> to vector<4x1x2x2xf32>
    %10 = vector.extract_strided_slice %3 {offsets = [0, 0, 0, 1, 0], sizes = [4, 1, 2, 1, 2], strides = [1, 1, 1, 1, 1]} : vector<4x1x2x2x2xf32> to vector<4x1x2x1x2xf32>
    %11 = vector.shape_cast %10 : vector<4x1x2x1x2xf32> to vector<4x1x2x2xf32>
    %12 = vector.broadcast %0 : f32 to vector<4x1x2x2xf32>
    %13 = arith.mulf %12, %5 : vector<4x1x2x2xf32>
    %14 = vector.broadcast %1 : f32 to vector<4x1x2x2xf32>
    %15 = arith.mulf %14, %11 : vector<4x1x2x2xf32>
    %16 = arith.addf %13, %15 : vector<4x1x2x2xf32>
    %17 = vector.broadcast %0 : f32 to vector<4x1x2x2xf32>
    %18 = arith.mulf %17, %9 : vector<4x1x2x2xf32>
    %19 = vector.broadcast %1 : f32 to vector<4x1x2x2xf32>
    %20 = arith.mulf %19, %7 : vector<4x1x2x2xf32>
    %21 = arith.subf %18, %20 : vector<4x1x2x2xf32>
    %22 = vector.broadcast %1 : f32 to vector<4x1x2x2xf32>
    %23 = arith.mulf %22, %9 : vector<4x1x2x2xf32>
    %24 = vector.broadcast %0 : f32 to vector<4x1x2x2xf32>
    %25 = arith.mulf %24, %7 : vector<4x1x2x2xf32>
    %26 = arith.addf %23, %25 : vector<4x1x2x2xf32>
    %cst = arith.constant 0.000000e+00 : f32
    %27 = arith.subf %cst, %1 : f32
    %28 = vector.broadcast %27 : f32 to vector<4x1x2x2xf32>
    %29 = arith.mulf %28, %5 : vector<4x1x2x2xf32>
    %30 = vector.broadcast %0 : f32 to vector<4x1x2x2xf32>
    %31 = arith.mulf %30, %11 : vector<4x1x2x2xf32>
    %32 = arith.addf %29, %31 : vector<4x1x2x2xf32>
    %33 = vector.shape_cast %16 : vector<4x1x2x2xf32> to vector<4x1x2x1x2xf32>
    %34 = vector.shape_cast %26 : vector<4x1x2x2xf32> to vector<4x1x2x1x2xf32>
    %35 = tpu.concatenate %33, %34 in 3 : vector<4x1x2x1x2xf32>, vector<4x1x2x1x2xf32> -> vector<4x1x2x2x2xf32>
    %c0_10 = arith.constant 0 : index
    %c0_11 = arith.constant 0 : index
    %c0_12 = arith.constant 0 : index
    %c0_13 = arith.constant 0 : index
    %c0_14 = arith.constant 0 : index
    %36 = vector.load %arg6[%c0_10, %c0_11, %c0_12, %c0_13, %c0_14] : memref<4x1x2x2x2xf32, #tpu.memory_space<vmem>>, vector<4x1x2x2x2xf32>
    tpu.vector_store %arg6[%c0_10, %c0_11, %c0_12, %c0_13, %c0_14], %35 {strides = array<i32>} : memref<4x1x2x2x2xf32, #tpu.memory_space<vmem>>, vector<4x1x2x2x2xf32>,
    %37 = vector.shape_cast %21 : vector<4x1x2x2xf32> to vector<4x1x2x1x2xf32>
    %38 = vector.shape_cast %32 : vector<4x1x2x2xf32> to vector<4x1x2x1x2xf32>
    %39 = tpu.concatenate %37, %38 in 3 : vector<4x1x2x1x2xf32>, vector<4x1x2x1x2xf32> -> vector<4x1x2x2x2xf32>
    %c0_15 = arith.constant 0 : index
    %c0_16 = arith.constant 0 : index
    %c0_17 = arith.constant 0 : index
    %c0_18 = arith.constant 0 : index
    %c0_19 = arith.constant 0 : index
    %40 = vector.load %arg7[%c0_15, %c0_16, %c0_17, %c0_18, %c0_19] : memref<4x1x2x2x2xf32, #tpu.memory_space<vmem>>, vector<4x1x2x2x2xf32>
    tpu.vector_store %arg7[%c0_15, %c0_16, %c0_17, %c0_18, %c0_19], %39 {strides = array<i32>} : memref<4x1x2x2x2xf32, #tpu.memory_space<vmem>>, vector<4x1x2x2x2xf32>,
    return
  }
  func.func @transform_0(%arg0: i32, %arg1: i32, %arg2: i32) -> i32 {
    %c0_i32 = arith.constant 0 : i32
    %c0_i32_0 = arith.constant 0 : i32
    return %c0_i32 : i32
  }
  func.func @transform_1(%arg0: i32, %arg1: i32, %arg2: i32) -> (i32, i32, i32, i32, i32) {
    %c1_i32 = arith.constant 1 : i32
    %c0_i32 = arith.constant 0 : i32
    %c0_i32_0 = arith.constant 0 : i32
    return %arg0, %c1_i32, %arg1, %c0_i32, %arg2 : i32, i32, i32, i32, i32
  }
  func.func @transform_2(%arg0: i32, %arg1: i32, %arg2: i32) -> (i32, i32, i32, i32, i32) {
    %c1_i32 = arith.constant 1 : i32
    %c0_i32 = arith.constant 0 : i32
    %c0_i32_0 = arith.constant 0 : i32
    return %arg0, %c1_i32, %arg1, %c0_i32, %arg2 : i32, i32, i32, i32, i32
  }
  func.func @transform_3(%arg0: i32, %arg1: i32, %arg2: i32) -> (i32, i32, i32, i32, i32) {
    %c1_i32 = arith.constant 1 : i32
    %c0_i32 = arith.constant 0 : i32
    %c0_i32_0 = arith.constant 0 : i32
    return %arg0, %c1_i32, %arg1, %c0_i32, %arg2 : i32, i32, i32, i32, i32
  }
  func.func @transform_4(%arg0: i32, %arg1: i32, %arg2: i32) -> (i32, i32, i32, i32, i32) {
    %c1_i32 = arith.constant 1 : i32
    %c0_i32 = arith.constant 0 : i32
    %c0_i32_0 = arith.constant 0 : i32
    return %arg0, %c1_i32, %arg1, %c0_i32, %arg2 : i32, i32, i32, i32, i32
  }
}

</mosaic_0001>

<llo_original>
// kernel: _apply_crot.1
$region0: #{_apply_crot.1}
  #allocation0 [shape = 'u32[]', space=smem, size = 0x4, offset = 0x4, fixed_abs, tag = 'smem constant byte address 0x4 - core index']
  #allocation1 [shape = 'u32[144,128]{1,0:T(1,128)}', space=vmem, size = 0x12000, scoped, tag = 'internal scratch']
  %s0 = inlined_call_operand.vmem [shape: f32[2], index: 0, kind: input, shape index: {}]
  %s1 = inlined_call_operand.vmem [shape: f32[4,2,2,2,2], index: 1, kind: input, shape index: {}, may-alias: {1,3}]
  %s2 = inlined_call_operand.vmem [shape: f32[4,2,2,2,2], index: 2, kind: input, shape index: {}, may-alias: {2,4}]
  %s3 = inlined_call_operand.vmem [shape: f32[4,2,2,2,2], index: 3, kind: output, shape index: {0}, may-alias: {1,3}]
  %s4 = inlined_call_operand.vmem [shape: f32[4,2,2,2,2], index: 4, kind: output, shape index: {1}, may-alias: {2,4}]
  %5 = xla_tuple %s3, %s4
  %s6 = sld [smem:[#allocation0]]
  $region190: #{_apply_crot.1} parent=0
    _
  %s8 = ssub.s32 1, %s6
  %s9 = scalar_select 0, %s8, %s6
  $region1: #{_apply_crot.1} parent=0
    #allocation2 [shape = 'u8[512]{0}', space=smem, size = 0x200, scoped, tag = 'input window, operand 0, single buffered']
    #allocation3 [shape = 's32[1]{0}', space=sflag, size = 0x4, scoped, tag = 'scoped memory for _apply_crot.1']
    #allocation4 [shape = 'u8[8192]{0}', space=vmem, size = 0x2000, scoped, tag = 'input window, operand 1, single buffered']
    #allocation5 [shape = 'u8[8192]{0}', space=vmem, size = 0x2000, scoped, tag = 'input window, operand 2, single buffered']
    #allocation6 [shape = 'u8[8192]{0}', space=vmem, size = 0x2000, scoped, tag = 'output window, operand 0, single buffered']
    #allocation7 [shape = 'u8[8192]{0}', space=vmem, size = 0x2000, scoped, tag = 'output window, operand 1, single buffered']
    %10 = vsyncpa [#allocation3], 0
    // Predicated region
    $region2: #{_apply_crot.1} parent=1 // pred_check
      _
    $region3: #{_apply_crot.1} parent=1 // pred_check_branch
      %12 = sbr.rel (0) target = $region5
    $region4: #{_apply_crot.1} parent=1 // pred_region
      %s14 = ssub.s32 16, 16
      %15 = vsyncadd [#allocation3], %s14
      %s17 = sshll.u32 %s0, 4
      %s18 = int_to_ptr.vmem [resolvable:$true] %s17
      %20 = dma.vmem_to_smem %s18, 16, [#allocation2], [#allocation3]
    $region5: #{_apply_crot.1} parent=1 // pred_fallthru
      _
    // Predicated region
    $region6: #{_apply_crot.1} parent=1 // pred_check
      _
    $region7: #{_apply_crot.1} parent=1 // pred_check_branch
      %22 = sbr.rel (0) target = $region9
    $region8: #{_apply_crot.1} parent=1 // pred_region
      %s23 = scalar_lea.vmem %s1, 4
      // Predicated region
      $region10: #{_apply_crot.1} parent=8 // pred_check
        _
      $region11: #{_apply_crot.1} parent=8 // pred_check_branch
        %25 = sbr.rel (0) target = $region13
      $region12: #{_apply_crot.1} parent=8 // pred_region
        // Predicated region
        $region14: #{_apply_crot.1} parent=12 // pred_check
          _
        $region15: #{_apply_crot.1} parent=12 // pred_check_branch
          %27 = sbr.rel target = $region17
        $region16: #{_apply_crot.1} parent=12 // pred_region
          // Predicated region
          $region29: #{_apply_crot.1} parent=16 // pred_check
            _
          $region30: #{_apply_crot.1} parent=16 // pred_check_branch
            %56 = sbr.rel (0) target = $region32
          $region31: #{_apply_crot.1} parent=16 // pred_region
            loop: start=0, step=1, limit=1
            $region33: #{_apply_crot.1} parent=31 // loop_pre_header
              _
            $region34: #{_apply_crot.1} parent=31 // loop_header
              %s58 = sphi 0, %s62
              %p59 = scmp.ge.s32.totalorder %s58, 1
              %s63 = sphi %s23, %s23
              %s64 = sphi [#allocation4], [#allocation4]
            $region35: #{_apply_crot.1} parent=31 // loop_header_branch
              %61 = sbr.rel (%p59) target = $region39
            $region36: #{_apply_crot.1} parent=31 // loop_body
              _
            $region37: #{_apply_crot.1} parent=31 // loop_footer
              %s62 = sadd.s32 1, %s58
            $region38: #{_apply_crot.1} parent=31 // loop_footer_branch
              %57 = sbr.rel target = $region34
            $region39: #{_apply_crot.1} parent=31 // loop_exit
              _
            loop: start=0, step=1, limit=1
            $region40: #{_apply_crot.1} parent=31 // loop_pre_header
              _
            $region41: #{_apply_crot.1} parent=31 // loop_header
              %s67 = sphi 0, %s71
              %p68 = scmp.ge.s32.totalorder %s67, 1
              %s72 = sphi %s23, %s23
              %s73 = sphi [#allocation4], [#allocation4]
            $region42: #{_apply_crot.1} parent=31 // loop_header_branch
              %70 = sbr.rel (%p68) target = $region46
            $region43: #{_apply_crot.1} parent=31 // loop_body
              %v74 = vld [vmem:[%s72] sm:$0x3]
              %75 = vst [vmem:[%s73] sm:$0x3] %v74
              %v76 = vld [vmem:[%s72 + $0x2] sm:$0x3]
              %77 = vst [vmem:[%s73 + $0x2] sm:$0x3] %v76
              %v78 = vld [vmem:[%s72 + $0x8] sm:$0x3]
              %79 = vst [vmem:[%s73 + $0x4] sm:$0x3] %v78
              %v80 = vld [vmem:[%s72 + $0xa] sm:$0x3]
              %81 = vst [vmem:[%s73 + $0x6] sm:$0x3] %v80
              %v82 = vld [vmem:[%s72 + $0x10] sm:$0x3]
              %83 = vst [vmem:[%s73 + $0x8] sm:$0x3] %v82
              %v84 = vld [vmem:[%s72 + $0x12] sm:$0x3]
              %85 = vst [vmem:[%s73 + $0xa] sm:$0x3] %v84
              %v86 = vld [vmem:[%s72 + $0x18] sm:$0x3]
              %87 = vst [vmem:[%s73 + $0xc] sm:$0x3] %v86
              %v88 = vld [vmem:[%s72 + $0x1a] sm:$0x3]
              %89 = vst [vmem:[%s73 + $0xe] sm:$0x3] %v88
            $region44: #{_apply_crot.1} parent=31 // loop_footer
              %s71 = sadd.s32 1, %s67
            $region45: #{_apply_crot.1} parent=31 // loop_footer_branch
              %66 = sbr.rel target = $region41
            $region46: #{_apply_crot.1} parent=31 // loop_exit
              _
          $region32: #{_apply_crot.1} parent=16 // pred_fallthru
            _
        $region17: #{_apply_crot.1} parent=12 // pred_fallthru
          _
        // Predicated region
        $region18: #{_apply_crot.1} parent=12 // pred_check
          _
        $region19: #{_apply_crot.1} parent=12 // pred_check_branch
          %29 = sbr.rel (0) target = $region21
        $region20: #{_apply_crot.1} parent=12 // pred_region
          loop: start=0, step=1, limit=1
          $region22: #{_apply_crot.1} parent=20 // loop_pre_header
            _
          $region23: #{_apply_crot.1} parent=20 // loop_header
            %s32 = sphi 0, %s36
            %p33 = scmp.ge.s32.totalorder %s32, 1
            %s37 = sphi %s23, %s23
            %s38 = sphi [#allocation4], [#allocation4]
          $region24: #{_apply_crot.1} parent=20 // loop_header_branch
            %35 = sbr.rel (%p33) target = $region28
          $region25: #{_apply_crot.1} parent=20 // loop_body
            %v39 = vld [vmem:[%s37] sm:$0x3]
            %40 = vst [vmem:[%s38] sm:$0x3] %v39
            %v41 = vld [vmem:[%s37 + $0x2] sm:$0x3]
            %42 = vst [vmem:[%s38 + $0x2] sm:$0x3] %v41
            %v43 = vld [vmem:[%s37 + $0x8] sm:$0x3]
            %44 = vst [vmem:[%s38 + $0x4] sm:$0x3] %v43
            %v45 = vld [vmem:[%s37 + $0xa] sm:$0x3]
            %46 = vst [vmem:[%s38 + $0x6] sm:$0x3] %v45
            %v47 = vld [vmem:[%s37 + $0x10] sm:$0x3]
            %48 = vst [vmem:[%s38 + $0x8] sm:$0x3] %v47
            %v49 = vld [vmem:[%s37 + $0x12] sm:$0x3]
            %50 = vst [vmem:[%s38 + $0xa] sm:$0x3] %v49
            %v51 = vld [vmem:[%s37 + $0x18] sm:$0x3]
            %52 = vst [vmem:[%s38 + $0xc] sm:$0x3] %v51
            %v53 = vld [vmem:[%s37 + $0x1a] sm:$0x3]
            %54 = vst [vmem:[%s38 + $0xe] sm:$0x3] %v53
          $region26: #{_apply_crot.1} parent=20 // loop_footer
            %s36 = sadd.s32 1, %s32
          $region27: #{_apply_crot.1} parent=20 // loop_footer_branch
            %31 = sbr.rel target = $region23
          $region28: #{_apply_crot.1} parent=20 // loop_exit
            _
        $region21: #{_apply_crot.1} parent=12 // pred_fallthru
          _
      $region13: #{_apply_crot.1} parent=8 // pred_fallthru
        _
      %90 = vnop
    $region9: #{_apply_crot.1} parent=1 // pred_fallthru
      _
    // Predicated region
    $region47: #{_apply_crot.1} parent=1 // pred_check
      _
    $region48: #{_apply_crot.1} parent=1 // pred_check_branch
      %92 = sbr.rel (0) target = $region50
    $region49: #{_apply_crot.1} parent=1 // pred_region
      %s93 = scalar_lea.vmem %s2, 4
      // Predicated region
      $region51: #{_apply_crot.1} parent=49 // pred_check
        _
      $region52: #{_apply_crot.1} parent=49 // pred_check_branch
        %95 = sbr.rel (0) target = $region54
      $region53: #{_apply_crot.1} parent=49 // pred_region
        // Predicated region
        $region55: #{_apply_crot.1} parent=53 // pred_check
          _
        $region56: #{_apply_crot.1} parent=53 // pred_check_branch
          %97 = sbr.rel target = $region58
        $region57: #{_apply_crot.1} parent=53 // pred_region
          // Predicated region
          $region70: #{_apply_crot.1} parent=57 // pred_check
            _
          $region71: #{_apply_crot.1} parent=57 // pred_check_branch
            %126 = sbr.rel (0) target = $region73
          $region72: #{_apply_crot.1} parent=57 // pred_region
            loop: start=0, step=1, limit=1
            $region74: #{_apply_crot.1} parent=72 // loop_pre_header
              _
            $region75: #{_apply_crot.1} parent=72 // loop_header
              %s128 = sphi 0, %s132
              %p129 = scmp.ge.s32.totalorder %s128, 1
              %s133 = sphi %s93, %s93
              %s134 = sphi [#allocation5], [#allocation5]
            $region76: #{_apply_crot.1} parent=72 // loop_header_branch
              %131 = sbr.rel (%p129) target = $region80
            $region77: #{_apply_crot.1} parent=72 // loop_body
              _
            $region78: #{_apply_crot.1} parent=72 // loop_footer
              %s132 = sadd.s32 1, %s128
            $region79: #{_apply_crot.1} parent=72 // loop_footer_branch
              %127 = sbr.rel target = $region75
            $region80: #{_apply_crot.1} parent=72 // loop_exit
              _
            loop: start=0, step=1, limit=1
            $region81: #{_apply_crot.1} parent=72 // loop_pre_header
              _
            $region82: #{_apply_crot.1} parent=72 // loop_header
              %s137 = sphi 0, %s141
              %p138 = scmp.ge.s32.totalorder %s137, 1
              %s142 = sphi %s93, %s93
              %s143 = sphi [#allocation5], [#allocation5]
            $region83: #{_apply_crot.1} parent=72 // loop_header_branch
              %140 = sbr.rel (%p138) target = $region87
            $region84: #{_apply_crot.1} parent=72 // loop_body
              %v144 = vld [vmem:[%s142] sm:$0x3]
              %145 = vst [vmem:[%s143] sm:$0x3] %v144
              %v146 = vld [vmem:[%s142 + $0x2] sm:$0x3]
              %147 = vst [vmem:[%s143 + $0x2] sm:$0x3] %v146
              %v148 = vld [vmem:[%s142 + $0x8] sm:$0x3]
              %149 = vst [vmem:[%s143 + $0x4] sm:$0x3] %v148
              %v150 = vld [vmem:[%s142 + $0xa] sm:$0x3]
              %151 = vst [vmem:[%s143 + $0x6] sm:$0x3] %v150
              %v152 = vld [vmem:[%s142 + $0x10] sm:$0x3]
              %153 = vst [vmem:[%s143 + $0x8] sm:$0x3] %v152
              %v154 = vld [vmem:[%s142 + $0x12] sm:$0x3]
              %155 = vst [vmem:[%s143 + $0xa] sm:$0x3] %v154
              %v156 = vld [vmem:[%s142 + $0x18] sm:$0x3]
              %157 = vst [vmem:[%s143 + $0xc] sm:$0x3] %v156
              %v158 = vld [vmem:[%s142 + $0x1a] sm:$0x3]
              %159 = vst [vmem:[%s143 + $0xe] sm:$0x3] %v158
            $region85: #{_apply_crot.1} parent=72 // loop_footer
              %s141 = sadd.s32 1, %s137
            $region86: #{_apply_crot.1} parent=72 // loop_footer_branch
              %136 = sbr.rel target = $region82
            $region87: #{_apply_crot.1} parent=72 // loop_exit
              _
          $region73: #{_apply_crot.1} parent=57 // pred_fallthru
            _
        $region58: #{_apply_crot.1} parent=53 // pred_fallthru
          _
        // Predicated region
        $region59: #{_apply_crot.1} parent=53 // pred_check
          _
        $region60: #{_apply_crot.1} parent=53 // pred_check_branch
          %99 = sbr.rel (0) target = $region62
        $region61: #{_apply_crot.1} parent=53 // pred_region
          loop: start=0, step=1, limit=1
          $region63: #{_apply_crot.1} parent=61 // loop_pre_header
            _
          $region64: #{_apply_crot.1} parent=61 // loop_header
            %s102 = sphi 0, %s106
            %p103 = scmp.ge.s32.totalorder %s102, 1
            %s107 = sphi %s93, %s93
            %s108 = sphi [#allocation5], [#allocation5]
          $region65: #{_apply_crot.1} parent=61 // loop_header_branch
            %105 = sbr.rel (%p103) target = $region69
          $region66: #{_apply_crot.1} parent=61 // loop_body
            %v109 = vld [vmem:[%s107] sm:$0x3]
            %110 = vst [vmem:[%s108] sm:$0x3] %v109
            %v111 = vld [vmem:[%s107 + $0x2] sm:$0x3]
            %112 = vst [vmem:[%s108 + $0x2] sm:$0x3] %v111
            %v113 = vld [vmem:[%s107 + $0x8] sm:$0x3]
            %114 = vst [vmem:[%s108 + $0x4] sm:$0x3] %v113
            %v115 = vld [vmem:[%s107 + $0xa] sm:$0x3]
            %116 = vst [vmem:[%s108 + $0x6] sm:$0x3] %v115
            %v117 = vld [vmem:[%s107 + $0x10] sm:$0x3]
            %118 = vst [vmem:[%s108 + $0x8] sm:$0x3] %v117
            %v119 = vld [vmem:[%s107 + $0x12] sm:$0x3]
            %120 = vst [vmem:[%s108 + $0xa] sm:$0x3] %v119
            %v121 = vld [vmem:[%s107 + $0x18] sm:$0x3]
            %122 = vst [vmem:[%s108 + $0xc] sm:$0x3] %v121
            %v123 = vld [vmem:[%s107 + $0x1a] sm:$0x3]
            %124 = vst [vmem:[%s108 + $0xe] sm:$0x3] %v123
          $region67: #{_apply_crot.1} parent=61 // loop_footer
            %s106 = sadd.s32 1, %s102
          $region68: #{_apply_crot.1} parent=61 // loop_footer_branch
            %101 = sbr.rel target = $region64
          $region69: #{_apply_crot.1} parent=61 // loop_exit
            _
        $region62: #{_apply_crot.1} parent=53 // pred_fallthru
          _
      $region54: #{_apply_crot.1} parent=49 // pred_fallthru
        _
      %160 = vnop
    $region50: #{_apply_crot.1} parent=1 // pred_fallthru
      _
    // Predicated region
    $region88: #{_apply_crot.1} parent=1 // pred_check
      _
    $region89: #{_apply_crot.1} parent=1 // pred_check_branch
      %162 = sbr.rel (0) target = $region91
    $region90: #{_apply_crot.1} parent=1 // pred_region
      %163 = dma.done [#allocation3], 16
    $region91: #{_apply_crot.1} parent=1 // pred_fallthru
      _
    // Predicated region
    $region92: #{_apply_crot.1} parent=1 // pred_check
      _
    $region93: #{_apply_crot.1} parent=1 // pred_check_branch
      %165 = sbr.rel (0) target = $region95
    $region94: #{_apply_crot.1} parent=1 // pred_region
      _
    $region95: #{_apply_crot.1} parent=1 // pred_fallthru
      _
    // Predicated region
    $region96: #{_apply_crot.1} parent=1 // pred_check
      _
    $region97: #{_apply_crot.1} parent=1 // pred_check_branch
      %167 = sbr.rel (0) target = $region99
    $region98: #{_apply_crot.1} parent=1 // pred_region
      _
    $region99: #{_apply_crot.1} parent=1 // pred_fallthru
      _
    %168 = sfence
    %s169 = sld [smem:[#allocation2]]
    %s170 = sld [smem:[#allocation2 + $0x1]]
    %v171 = vld [vmem:[#allocation4] sm:$0x3]
    %v172 = vld [vmem:[#allocation4 + $0x2] sm:$0x3]
    %v173 = vld [vmem:[#allocation4 + $0x4] sm:$0x3]
    %v174 = vld [vmem:[#allocation4 + $0x6] sm:$0x3]
    %v175 = vld [vmem:[#allocation4 + $0x8] sm:$0x3]
    %v176 = vld [vmem:[#allocation4 + $0xa] sm:$0x3]
    %v177 = vld [vmem:[#allocation4 + $0xc] sm:$0x3]
    %v178 = vld [vmem:[#allocation4 + $0xe] sm:$0x3]
    %v179 = vld [vmem:[#allocation5] sm:$0x3]
    %v180 = vld [vmem:[#allocation5 + $0x2] sm:$0x3]
    %v181 = vld [vmem:[#allocation5 + $0x4] sm:$0x3]
    %v182 = vld [vmem:[#allocation5 + $0x6] sm:$0x3]
    %v183 = vld [vmem:[#allocation5 + $0x8] sm:$0x3]
    %v184 = vld [vmem:[#allocation5 + $0xa] sm:$0x3]
    %v185 = vld [vmem:[#allocation5 + $0xc] sm:$0x3]
    %v186 = vld [vmem:[#allocation5 + $0xe] sm:$0x3]
    %v187 = vstv %s169
    %v188 = vmul.f32 %v187, %v171
    %v189 = vmul.f32 %v187, %v172
    %v190 = vmul.f32 %v187, %v173
    %v191 = vmul.f32 %v187, %v174
    %v192 = vmul.f32 %v187, %v175
    %v193 = vmul.f32 %v187, %v176
    %v194 = vmul.f32 %v187, %v177
    %v195 = vmul.f32 %v187, %v178
    %v196 = vstv %s170
    %v197 = vmul.f32 %v196, %v179
    %v198 = vmul.f32 %v196, %v180
    %v199 = vmul.f32 %v196, %v181
    %v200 = vmul.f32 %v196, %v182
    %v201 = vmul.f32 %v196, %v183
    %v202 = vmul.f32 %v196, %v184
    %v203 = vmul.f32 %v196, %v185
    %v204 = vmul.f32 %v196, %v186
    %v213 = vrot.slane %v197, 1
    %v214 = vrot.slane %v198, 1
    %v215 = vrot.slane %v199, 1
    %v216 = vrot.slane %v200, 1
    %v217 = vrot.slane %v201, 1
    %v218 = vrot.slane %v202, 1
    %v219 = vrot.slane %v203, 1
    %v220 = vrot.slane %v204, 1
    %v229 = vadd.f32 %v188, %v213
    %v230 = vadd.f32 %v189, %v214
    %v231 = vadd.f32 %v190, %v215
    %v232 = vadd.f32 %v191, %v216
    %v233 = vadd.f32 %v192, %v217
    %v234 = vadd.f32 %v193, %v218
    %v235 = vadd.f32 %v194, %v219
    %v236 = vadd.f32 %v195, %v220
    %v237 = vmul.f32 %v187, %v179
    %v238 = vmul.f32 %v187, %v180
    %v239 = vmul.f32 %v187, %v181
    %v240 = vmul.f32 %v187, %v182
    %v241 = vmul.f32 %v187, %v183
    %v242 = vmul.f32 %v187, %v184
    %v243 = vmul.f32 %v187, %v185
    %v244 = vmul.f32 %v187, %v186
    %v245 = vmul.f32 %v196, %v171
    %v246 = vmul.f32 %v196, %v172
    %v247 = vmul.f32 %v196, %v173
    %v248 = vmul.f32 %v196, %v174
    %v249 = vmul.f32 %v196, %v175
    %v250 = vmul.f32 %v196, %v176
    %v251 = vmul.f32 %v196, %v177
    %v252 = vmul.f32 %v196, %v178
    %v261 = vrot.slane %v245, 1
    %v262 = vrot.slane %v246, 1
    %v263 = vrot.slane %v247, 1
    %v264 = vrot.slane %v248, 1
    %v265 = vrot.slane %v249, 1
    %v266 = vrot.slane %v250, 1
    %v267 = vrot.slane %v251, 1
    %v268 = vrot.slane %v252, 1
    %v277 = vsub.f32 %v237, %v261
    %v278 = vsub.f32 %v238, %v262
    %v279 = vsub.f32 %v239, %v263
    %v280 = vsub.f32 %v240, %v264
    %v281 = vsub.f32 %v241, %v265
    %v282 = vsub.f32 %v242, %v266
    %v283 = vsub.f32 %v243, %v267
    %v284 = vsub.f32 %v244, %v268
    %v293 = vrot.slane %v188, 1
    %v294 = vrot.slane %v189, 1
    %v295 = vrot.slane %v190, 1
    %v296 = vrot.slane %v191, 1
    %v297 = vrot.slane %v192, 1
    %v298 = vrot.slane %v193, 1
    %v299 = vrot.slane %v194, 1
    %v300 = vrot.slane %v195, 1
    %v309 = vadd.f32 %v197, %v293
    %v310 = vadd.f32 %v198, %v294
    %v311 = vadd.f32 %v199, %v295
    %v312 = vadd.f32 %v200, %v296
    %v313 = vadd.f32 %v201, %v297
    %v314 = vadd.f32 %v202, %v298
    %v315 = vadd.f32 %v203, %v299
    %v316 = vadd.f32 %v204, %v300
    %s317 = ssub.f32 0.0, %s170
    %v318 = vstv %s317
    %v319 = vmul.f32 %v318, %v171
    %v320 = vmul.f32 %v318, %v172
    %v321 = vmul.f32 %v318, %v173
    %v322 = vmul.f32 %v318, %v174
    %v323 = vmul.f32 %v318, %v175
    %v324 = vmul.f32 %v318, %v176
    %v325 = vmul.f32 %v318, %v177
    %v326 = vmul.f32 %v318, %v178
    %v335 = vrot.slane %v237, 1
    %v336 = vrot.slane %v238, 1
    %v337 = vrot.slane %v239, 1
    %v338 = vrot.slane %v240, 1
    %v339 = vrot.slane %v241, 1
    %v340 = vrot.slane %v242, 1
    %v341 = vrot.slane %v243, 1
    %v342 = vrot.slane %v244, 1
    %v351 = vadd.f32 %v319, %v335
    %v352 = vadd.f32 %v320, %v336
    %v353 = vadd.f32 %v321, %v337
    %v354 = vadd.f32 %v322, %v338
    %v355 = vadd.f32 %v323, %v339
    %v356 = vadd.f32 %v324, %v340
    %v357 = vadd.f32 %v325, %v341
    %v358 = vadd.f32 %v326, %v342
    %v367 = vrot.slane %v309, 7
    %v368 = vrot.slane %v310, 7
    %v369 = vrot.slane %v311, 7
    %v370 = vrot.slane %v312, 7
    %v371 = vrot.slane %v313, 7
    %v372 = vrot.slane %v314, 7
    %v373 = vrot.slane %v315, 7
    %v374 = vrot.slane %v316, 7
    %vm383 = vcmask 1040384
    %v384 = vsel %vm383, %v229, %v367
    %v385 = vsel %vm383, %v230, %v368
    %v386 = vsel %vm383, %v231, %v369
    %v387 = vsel %vm383, %v232, %v370
    %v388 = vsel %vm383, %v233, %v371
    %v389 = vsel %vm383, %v234, %v372
    %v390 = vsel %vm383, %v235, %v373
    %v391 = vsel %vm383, %v236, %v374
    %vm392 = vcmask 9216
    %393 = vst.msk [vmem:[#allocation6] sm:$0x3] %vm392, %v384
    %394 = vst.msk [vmem:[#allocation6 + $0x2] sm:$0x3] %vm392, %v385
    %395 = vst.msk [vmem:[#allocation6 + $0x4] sm:$0x3] %vm392, %v386
    %396 = vst.msk [vmem:[#allocation6 + $0x6] sm:$0x3] %vm392, %v387
    %397 = vst.msk [vmem:[#allocation6 + $0x8] sm:$0x3] %vm392, %v388
    %398 = vst.msk [vmem:[#allocation6 + $0xa] sm:$0x3] %vm392, %v389
    %399 = vst.msk [vmem:[#allocation6 + $0xc] sm:$0x3] %vm392, %v390
    %400 = vst.msk [vmem:[#allocation6 + $0xe] sm:$0x3] %vm392, %v391
    %v409 = vrot.slane %v351, 7
    %v410 = vrot.slane %v352, 7
    %v411 = vrot.slane %v353, 7
    %v412 = vrot.slane %v354, 7
    %v413 = vrot.slane %v355, 7
    %v414 = vrot.slane %v356, 7
    %v415 = vrot.slane %v357, 7
    %v416 = vrot.slane %v358, 7
    %v425 = vsel %vm383, %v277, %v409
    %v426 = vsel %vm383, %v278, %v410
    %v427 = vsel %vm383, %v279, %v411
    %v428 = vsel %vm383, %v280, %v412
    %v429 = vsel %vm383, %v281, %v413
    %v430 = vsel %vm383, %v282, %v414
    %v431 = vsel %vm383, %v283, %v415
    %v432 = vsel %vm383, %v284, %v416
    %433 = vst.msk [vmem:[#allocation7] sm:$0x3] %vm392, %v425
    %434 = vst.msk [vmem:[#allocation7 + $0x2] sm:$0x3] %vm392, %v426
    %435 = vst.msk [vmem:[#allocation7 + $0x4] sm:$0x3] %vm392, %v427
    %436 = vst.msk [vmem:[#allocation7 + $0x6] sm:$0x3] %vm392, %v428
    %437 = vst.msk [vmem:[#allocation7 + $0x8] sm:$0x3] %vm392, %v429
    %438 = vst.msk [vmem:[#allocation7 + $0xa] sm:$0x3] %vm392, %v430
    %439 = vst.msk [vmem:[#allocation7 + $0xc] sm:$0x3] %vm392, %v431
    %440 = vst.msk [vmem:[#allocation7 + $0xe] sm:$0x3] %vm392, %v432
    // Predicated region
    $region100: #{_apply_crot.1} parent=1 // pred_check
      _
    $region101: #{_apply_crot.1} parent=1 // pred_check_branch
      %442 = sbr.rel (0) target = $region103
    $region102: #{_apply_crot.1} parent=1 // pred_region
      %s443 = scalar_lea.vmem %s3, 4
      // Predicated region
      $region104: #{_apply_crot.1} parent=102 // pred_check
        _
      $region105: #{_apply_crot.1} parent=102 // pred_check_branch
        %445 = sbr.rel (0) target = $region107
      $region106: #{_apply_crot.1} parent=102 // pred_region
        // Predicated region
        $region108: #{_apply_crot.1} parent=106 // pred_check
          _
        $region109: #{_apply_crot.1} parent=106 // pred_check_branch
          %447 = sbr.rel target = $region111
        $region110: #{_apply_crot.1} parent=106 // pred_region
          // Predicated region
          $region123: #{_apply_crot.1} parent=110 // pred_check
            _
          $region124: #{_apply_crot.1} parent=110 // pred_check_branch
            %476 = sbr.rel (0) target = $region126
          $region125: #{_apply_crot.1} parent=110 // pred_region
            loop: start=0, step=1, limit=1
            $region127: #{_apply_crot.1} parent=125 // loop_pre_header
              _
            $region128: #{_apply_crot.1} parent=125 // loop_header
              %s478 = sphi 0, %s482
              %p479 = scmp.ge.s32.totalorder %s478, 1
              %s483 = sphi [#allocation6], [#allocation6]
              %s484 = sphi %s443, %s443
            $region129: #{_apply_crot.1} parent=125 // loop_header_branch
              %481 = sbr.rel (%p479) target = $region133
            $region130: #{_apply_crot.1} parent=125 // loop_body
              _
            $region131: #{_apply_crot.1} parent=125 // loop_footer
              %s482 = sadd.s32 1, %s478
            $region132: #{_apply_crot.1} parent=125 // loop_footer_branch
              %477 = sbr.rel target = $region128
            $region133: #{_apply_crot.1} parent=125 // loop_exit
              _
            loop: start=0, step=1, limit=1
            $region134: #{_apply_crot.1} parent=125 // loop_pre_header
              _
            $region135: #{_apply_crot.1} parent=125 // loop_header
              %s487 = sphi 0, %s491
              %p488 = scmp.ge.s32.totalorder %s487, 1
              %s492 = sphi [#allocation6], [#allocation6]
              %s493 = sphi %s443, %s443
            $region136: #{_apply_crot.1} parent=125 // loop_header_branch
              %490 = sbr.rel (%p488) target = $region140
            $region137: #{_apply_crot.1} parent=125 // loop_body
              %v494 = vld [vmem:[%s492] sm:$0x3]
              %495 = vst [vmem:[%s493] sm:$0x3] %v494
              %v496 = vld [vmem:[%s492 + $0x2] sm:$0x3]
              %497 = vst [vmem:[%s493 + $0x2] sm:$0x3] %v496
              %v498 = vld [vmem:[%s492 + $0x4] sm:$0x3]
              %499 = vst [vmem:[%s493 + $0x8] sm:$0x3] %v498
              %v500 = vld [vmem:[%s492 + $0x6] sm:$0x3]
              %501 = vst [vmem:[%s493 + $0xa] sm:$0x3] %v500
              %v502 = vld [vmem:[%s492 + $0x8] sm:$0x3]
              %503 = vst [vmem:[%s493 + $0x10] sm:$0x3] %v502
              %v504 = vld [vmem:[%s492 + $0xa] sm:$0x3]
              %505 = vst [vmem:[%s493 + $0x12] sm:$0x3] %v504
              %v506 = vld [vmem:[%s492 + $0xc] sm:$0x3]
              %507 = vst [vmem:[%s493 + $0x18] sm:$0x3] %v506
              %v508 = vld [vmem:[%s492 + $0xe] sm:$0x3]
              %509 = vst [vmem:[%s493 + $0x1a] sm:$0x3] %v508
            $region138: #{_apply_crot.1} parent=125 // loop_footer
              %s491 = sadd.s32 1, %s487
            $region139: #{_apply_crot.1} parent=125 // loop_footer_branch
              %486 = sbr.rel target = $region135
            $region140: #{_apply_crot.1} parent=125 // loop_exit
              _
          $region126: #{_apply_crot.1} parent=110 // pred_fallthru
            _
        $region111: #{_apply_crot.1} parent=106 // pred_fallthru
          _
        // Predicated region
        $region112: #{_apply_crot.1} parent=106 // pred_check
          _
        $region113: #{_apply_crot.1} parent=106 // pred_check_branch
          %449 = sbr.rel (0) target = $region115
        $region114: #{_apply_crot.1} parent=106 // pred_region
          loop: start=0, step=1, limit=1
          $region116: #{_apply_crot.1} parent=114 // loop_pre_header
            _
          $region117: #{_apply_crot.1} parent=114 // loop_header
            %s452 = sphi 0, %s456
            %p453 = scmp.ge.s32.totalorder %s452, 1
            %s457 = sphi [#allocation6], [#allocation6]
            %s458 = sphi %s443, %s443
          $region118: #{_apply_crot.1} parent=114 // loop_header_branch
            %455 = sbr.rel (%p453) target = $region122
          $region119: #{_apply_crot.1} parent=114 // loop_body
            %v459 = vld [vmem:[%s457] sm:$0x3]
            %460 = vst [vmem:[%s458] sm:$0x3] %v459
            %v461 = vld [vmem:[%s457 + $0x2] sm:$0x3]
            %462 = vst [vmem:[%s458 + $0x2] sm:$0x3] %v461
            %v463 = vld [vmem:[%s457 + $0x4] sm:$0x3]
            %464 = vst [vmem:[%s458 + $0x8] sm:$0x3] %v463
            %v465 = vld [vmem:[%s457 + $0x6] sm:$0x3]
            %466 = vst [vmem:[%s458 + $0xa] sm:$0x3] %v465
            %v467 = vld [vmem:[%s457 + $0x8] sm:$0x3]
            %468 = vst [vmem:[%s458 + $0x10] sm:$0x3] %v467
            %v469 = vld [vmem:[%s457 + $0xa] sm:$0x3]
            %470 = vst [vmem:[%s458 + $0x12] sm:$0x3] %v469
            %v471 = vld [vmem:[%s457 + $0xc] sm:$0x3]
            %472 = vst [vmem:[%s458 + $0x18] sm:$0x3] %v471
            %v473 = vld [vmem:[%s457 + $0xe] sm:$0x3]
            %474 = vst [vmem:[%s458 + $0x1a] sm:$0x3] %v473
          $region120: #{_apply_crot.1} parent=114 // loop_footer
            %s456 = sadd.s32 1, %s452
          $region121: #{_apply_crot.1} parent=114 // loop_footer_branch
            %451 = sbr.rel target = $region117
          $region122: #{_apply_crot.1} parent=114 // loop_exit
            _
        $region115: #{_apply_crot.1} parent=106 // pred_fallthru
          _
      $region107: #{_apply_crot.1} parent=102 // pred_fallthru
        _
      %510 = vnop
    $region103: #{_apply_crot.1} parent=1 // pred_fallthru
      _
    // Predicated region
    $region141: #{_apply_crot.1} parent=1 // pred_check
      _
    $region142: #{_apply_crot.1} parent=1 // pred_check_branch
      %512 = sbr.rel (0) target = $region144
    $region143: #{_apply_crot.1} parent=1 // pred_region
      %s513 = scalar_lea.vmem %s4, 4
      // Predicated region
      $region145: #{_apply_crot.1} parent=143 // pred_check
        _
      $region146: #{_apply_crot.1} parent=143 // pred_check_branch
        %515 = sbr.rel (0) target = $region148
      $region147: #{_apply_crot.1} parent=143 // pred_region
        // Predicated region
        $region149: #{_apply_crot.1} parent=147 // pred_check
          _
        $region150: #{_apply_crot.1} parent=147 // pred_check_branch
          %517 = sbr.rel target = $region152
        $region151: #{_apply_crot.1} parent=147 // pred_region
          // Predicated region
          $region164: #{_apply_crot.1} parent=151 // pred_check
            _
          $region165: #{_apply_crot.1} parent=151 // pred_check_branch
            %546 = sbr.rel (0) target = $region167
          $region166: #{_apply_crot.1} parent=151 // pred_region
            loop: start=0, step=1, limit=1
            $region168: #{_apply_crot.1} parent=166 // loop_pre_header
              _
            $region169: #{_apply_crot.1} parent=166 // loop_header
              %s548 = sphi 0, %s552
              %p549 = scmp.ge.s32.totalorder %s548, 1
              %s553 = sphi [#allocation7], [#allocation7]
              %s554 = sphi %s513, %s513
            $region170: #{_apply_crot.1} parent=166 // loop_header_branch
              %551 = sbr.rel (%p549) target = $region174
            $region171: #{_apply_crot.1} parent=166 // loop_body
              _
            $region172: #{_apply_crot.1} parent=166 // loop_footer
              %s552 = sadd.s32 1, %s548
            $region173: #{_apply_crot.1} parent=166 // loop_footer_branch
              %547 = sbr.rel target = $region169
            $region174: #{_apply_crot.1} parent=166 // loop_exit
              _
            loop: start=0, step=1, limit=1
            $region175: #{_apply_crot.1} parent=166 // loop_pre_header
              _
            $region176: #{_apply_crot.1} parent=166 // loop_header
              %s557 = sphi 0, %s561
              %p558 = scmp.ge.s32.totalorder %s557, 1
              %s562 = sphi [#allocation7], [#allocation7]
              %s563 = sphi %s513, %s513
            $region177: #{_apply_crot.1} parent=166 // loop_header_branch
              %560 = sbr.rel (%p558) target = $region181
            $region178: #{_apply_crot.1} parent=166 // loop_body
              %v564 = vld [vmem:[%s562] sm:$0x3]
              %565 = vst [vmem:[%s563] sm:$0x3] %v564
              %v566 = vld [vmem:[%s562 + $0x2] sm:$0x3]
              %567 = vst [vmem:[%s563 + $0x2] sm:$0x3] %v566
              %v568 = vld [vmem:[%s562 + $0x4] sm:$0x3]
              %569 = vst [vmem:[%s563 + $0x8] sm:$0x3] %v568
              %v570 = vld [vmem:[%s562 + $0x6] sm:$0x3]
              %571 = vst [vmem:[%s563 + $0xa] sm:$0x3] %v570
              %v572 = vld [vmem:[%s562 + $0x8] sm:$0x3]
              %573 = vst [vmem:[%s563 + $0x10] sm:$0x3] %v572
              %v574 = vld [vmem:[%s562 + $0xa] sm:$0x3]
              %575 = vst [vmem:[%s563 + $0x12] sm:$0x3] %v574
              %v576 = vld [vmem:[%s562 + $0xc] sm:$0x3]
              %577 = vst [vmem:[%s563 + $0x18] sm:$0x3] %v576
              %v578 = vld [vmem:[%s562 + $0xe] sm:$0x3]
              %579 = vst [vmem:[%s563 + $0x1a] sm:$0x3] %v578
            $region179: #{_apply_crot.1} parent=166 // loop_footer
              %s561 = sadd.s32 1, %s557
            $region180: #{_apply_crot.1} parent=166 // loop_footer_branch
              %556 = sbr.rel target = $region176
            $region181: #{_apply_crot.1} parent=166 // loop_exit
              _
          $region167: #{_apply_crot.1} parent=151 // pred_fallthru
            _
        $region152: #{_apply_crot.1} parent=147 // pred_fallthru
          _
        // Predicated region
        $region153: #{_apply_crot.1} parent=147 // pred_check
          _
        $region154: #{_apply_crot.1} parent=147 // pred_check_branch
          %519 = sbr.rel (0) target = $region156
        $region155: #{_apply_crot.1} parent=147 // pred_region
          loop: start=0, step=1, limit=1
          $region157: #{_apply_crot.1} parent=155 // loop_pre_header
            _
          $region158: #{_apply_crot.1} parent=155 // loop_header
            %s522 = sphi 0, %s526
            %p523 = scmp.ge.s32.totalorder %s522, 1
            %s527 = sphi [#allocation7], [#allocation7]
            %s528 = sphi %s513, %s513
          $region159: #{_apply_crot.1} parent=155 // loop_header_branch
            %525 = sbr.rel (%p523) target = $region163
          $region160: #{_apply_crot.1} parent=155 // loop_body
            %v529 = vld [vmem:[%s527] sm:$0x3]
            %530 = vst [vmem:[%s528] sm:$0x3] %v529
            %v531 = vld [vmem:[%s527 + $0x2] sm:$0x3]
            %532 = vst [vmem:[%s528 + $0x2] sm:$0x3] %v531
            %v533 = vld [vmem:[%s527 + $0x4] sm:$0x3]
            %534 = vst [vmem:[%s528 + $0x8] sm:$0x3] %v533
            %v535 = vld [vmem:[%s527 + $0x6] sm:$0x3]
            %536 = vst [vmem:[%s528 + $0xa] sm:$0x3] %v535
            %v537 = vld [vmem:[%s527 + $0x8] sm:$0x3]
            %538 = vst [vmem:[%s528 + $0x10] sm:$0x3] %v537
            %v539 = vld [vmem:[%s527 + $0xa] sm:$0x3]
            %540 = vst [vmem:[%s528 + $0x12] sm:$0x3] %v539
            %v541 = vld [vmem:[%s527 + $0xc] sm:$0x3]
            %542 = vst [vmem:[%s528 + $0x18] sm:$0x3] %v541
            %v543 = vld [vmem:[%s527 + $0xe] sm:$0x3]
            %544 = vst [vmem:[%s528 + $0x1a] sm:$0x3] %v543
          $region161: #{_apply_crot.1} parent=155 // loop_footer
            %s526 = sadd.s32 1, %s522
          $region162: #{_apply_crot.1} parent=155 // loop_footer_branch
            %521 = sbr.rel target = $region158
          $region163: #{_apply_crot.1} parent=155 // loop_exit
            _
        $region156: #{_apply_crot.1} parent=147 // pred_fallthru
          _
      $region148: #{_apply_crot.1} parent=143 // pred_fallthru
        _
      %580 = vnop
    $region144: #{_apply_crot.1} parent=1 // pred_fallthru
      _
    // Predicated region
    $region182: #{_apply_crot.1} parent=1 // pred_check
      _
    $region183: #{_apply_crot.1} parent=1 // pred_check_branch
      %582 = sbr.rel (0) target = $region185
    $region184: #{_apply_crot.1} parent=1 // pred_region
      _
    $region185: #{_apply_crot.1} parent=1 // pred_fallthru
      _
    // Predicated region
    $region186: #{_apply_crot.1} parent=1 // pred_check
      _
    $region187: #{_apply_crot.1} parent=1 // pred_check_branch
      %584 = sbr.rel (0) target = $region189
    $region188: #{_apply_crot.1} parent=1 // pred_region
      _
    $region189: #{_apply_crot.1} parent=1 // pred_fallthru
      _
    %585 = vsyncpa [#allocation3], 1

</llo_original>
